<compile_context>
chip_gen: v7x
topology: tpu7x:2x2x1
jax: 0.10.0
libtpu: 0.0.40
codegen_flags: <defaults>
</compile_context>

<pallas_src>
import functools

import jax
import jax.numpy as jnp
from jax.experimental import pallas as pl
from jax.experimental.pallas import tpu as pltpu


def _round_up(x, m):
    return ((x + m - 1) // m) * m


def _device_kind():
    try:
        return jax.devices()[0].device_kind.lower()
    except Exception:
        return ""


def _mlp_kernel(h_ref, r_ref, t_ref, w1_ref, b1_ref, w2_ref, b2_ref,
                w3_ref, b3_ref, out_ref, *, k_pad, bf16_act):
    tile_b, e = h_ref.shape
    k = 3 * e

    # In-kernel pack of cat([h, r, t], dim=1) + lane zero-pad + bf16 cast.
    parts = [h_ref[...], r_ref[...], t_ref[...]]
    if k_pad > k:
        parts.append(jnp.zeros((tile_b, k_pad - k), h_ref.dtype))
    x = jnp.concatenate(parts, axis=-1).astype(jnp.bfloat16)

    # layer_1: bf16 MXU matmul, f32 accumulate + bias; tanh in bf16 on
    # v6e/v7x (EUP bf16), f32 on v5e.
    z1 = jnp.dot(x, w1_ref[...], preferred_element_type=jnp.float32) + b1_ref[...]
    if bf16_act:
        x1 = jnp.tanh(z1.astype(jnp.bfloat16))
    else:
        x1 = jnp.tanh(z1).astype(jnp.bfloat16)

    # layer_2 + tanh (same policy).
    z2 = jnp.dot(x1, w2_ref[...], preferred_element_type=jnp.float32) + b2_ref[...]
    if bf16_act:
        x2 = jnp.tanh(z2.astype(jnp.bfloat16))
    else:
        x2 = jnp.tanh(z2).astype(jnp.bfloat16)

    # dropout(p=0.5): inference/eval mode -> identity.
    # TODO(synk): training-mode stochastic dropout not emitted.

    # hidden2label: (tile_b, H_PAD) · (H_PAD, 1) -> (tile_b, 1).
    y = jnp.dot(x2, w3_ref[...], preferred_element_type=jnp.float32)
    out_ref[...] = y + b3_ref[0, 0]


def prepare_params(raw_params, embedding_dim, hidden_dim):
    """Zero-pad / cast the nn.Module parameters once, wrapper-side.

    raw_params = (w1 [3E, H] (torch weight transposed), b1 [H],
                  w2 [H, H], b2 [H], w3 [H, 1], b3 scalar), all f32.
    """
    w1, b1, w2, b2, w3, b3 = raw_params
    E, H = embedding_dim, hidden_dim
    K = 3 * E
    K_PAD = _round_up(K, 128)
    H_PAD = _round_up(H, 128)

    w1p = jnp.zeros((K_PAD, H_PAD), jnp.float32).at[:K, :H].set(w1)
    w2p = jnp.zeros((H_PAD, H_PAD), jnp.float32).at[:H, :H].set(w2)
    w3p = jnp.zeros((H_PAD, 1), jnp.float32).at[:H, 0].set(w3.reshape(-1))
    b1p = jnp.zeros((1, H_PAD), jnp.float32).at[0, :H].set(b1.reshape(-1))
    b2p = jnp.zeros((1, H_PAD), jnp.float32).at[0, :H].set(b2.reshape(-1))
    b3p = jnp.asarray(b3, jnp.float32).reshape(1, 1)

    # bf16 matmul operands; biases stay f32 (accumulate/bias path is f32).
    return (w1p.astype(jnp.bfloat16), b1p,
            w2p.astype(jnp.bfloat16), b2p,
            w3p.astype(jnp.bfloat16), b3p)


@functools.partial(
    jax.jit,
    static_argnames=("block_b", "bf16_act", "num_cores", "vmem_limit"))
def _forward(batch_d, batch_h, batch_r, batch_t, params, *,
             block_b, bf16_act, num_cores, vmem_limit):
    del batch_d  # unused by the reference forward as well
    w1p, b1p, w2p, b2p, w3p, b3p = params
    B0, E = batch_h.shape
    K_PAD, H_PAD = w1p.shape

    # Tiny batches only (< 128 rows): pad rows so the single (128, E) block
    # is well-formed.  For B >= 128 no wrapper-side copy is made — the last
    # grid block is simply partial (masked reads/writes).
    if B0 < 128:
        pad = 128 - B0
        batch_h = jnp.pad(batch_h, ((0, pad), (0, 0)))
        batch_r = jnp.pad(batch_r, ((0, pad), (0, 0)))
        batch_t = jnp.pad(batch_t, ((0, pad), (0, 0)))
    B = batch_h.shape[0]

    # Batch tile: multiple of 128, no larger than the (floor-128) batch, and
    # on v7x small enough that both TensorCores get at least one tile.
    tile_b = min(_round_up(block_b, 128), max(128, (B // 128) * 128))
    if num_cores > 1:
        tile_b = min(tile_b, _round_up(pl.cdiv(B, num_cores), 128))
    grid = (pl.cdiv(B, tile_b),)

    kernel = functools.partial(_mlp_kernel, k_pad=K_PAD, bf16_act=bf16_act)

    out = pl.pallas_call(
        kernel,
        out_shape=jax.ShapeDtypeStruct((B, 1), jnp.float32),
        grid=grid,
        in_specs=[
            pl.BlockSpec((tile_b, E), lambda i: (i, 0)),        # h (streamed)
            pl.BlockSpec((tile_b, E), lambda i: (i, 0)),        # r (streamed)
            pl.BlockSpec((tile_b, E), lambda i: (i, 0)),        # t (streamed)
            pl.BlockSpec((K_PAD, H_PAD), lambda i: (0, 0)),     # W1 (VMEM-resident)
            pl.BlockSpec((1, H_PAD), lambda i: (0, 0)),         # b1
            pl.BlockSpec((H_PAD, H_PAD), lambda i: (0, 0)),     # W2
            pl.BlockSpec((1, H_PAD), lambda i: (0, 0)),         # b2
            pl.BlockSpec((H_PAD, 1), lambda i: (0, 0)),         # W3
            pl.BlockSpec(memory_space=pltpu.MemorySpace.SMEM),  # b3 scalar
        ],
        out_specs=pl.BlockSpec((tile_b, 1), lambda i: (i, 0)),
        compiler_params=pltpu.CompilerParams(
            dimension_semantics=("parallel",),   # batch tiles over v7x's 2 TCs
            vmem_limit_bytes=vmem_limit,
        ),
    )(batch_h, batch_r, batch_t, w1p, b1p, w2p, b2p, w3p, b3p)

    return out.reshape(-1)[:B0]


def candidate_filtering_forward(batch_d, batch_h, batch_r, batch_t, params,
                                block_b=4096):
    """Returns y_hat with shape [B] (logits), matching y_hat.view(-1)."""
    kind = _device_kind()
    # bf16 tanh only where the VPU/EUP support bf16 (v6e / v7x).
    bf16_act = ("v6" in kind) or ("v7" in kind)
    num_cores = 2 if "v7" in kind else 1
    # Per-tile VMEM at tile_b=4096, K_PAD=H_PAD=128: 3x(4096,32)f32 inputs
    # double-buffered (~3 MiB) + f32/bf16 intermediates x/z1/x1/z2/x2
    # (~10 MiB) + weights (<0.1 MiB) ~= 13 MiB.  v7x has only 64 MiB physical
    # VMEM, so cap the scoped limit lower there; v5e/v6e have 128 MiB.
    vmem_limit = (48 if "v7" in kind else 96) * 1024 * 1024
    return _forward(batch_d, batch_h, batch_r, batch_t, params,
                    block_b=block_b, bf16_act=bf16_act,
                    num_cores=num_cores, vmem_limit=vmem_limit)


def init_params(embedding_dim, hidden_dim, key):
    """Deterministic synthetic parameters, shapes matching the nn.Module."""
    E, H = embedding_dim, hidden_dim
    ks = jax.random.split(key, 6)
    s1 = 1.0 / jnp.sqrt(3.0 * E)
    s2 = 1.0 / jnp.sqrt(1.0 * H)
    w1 = jax.random.uniform(ks[0], (3 * E, H), jnp.float32, -s1, s1)  # [in, out]
    b1 = jax.random.uniform(ks[1], (H,), jnp.float32, -s1, s1)
    w2 = jax.random.uniform(ks[2], (H, H), jnp.float32, -s2, s2)
    b2 = jax.random.uniform(ks[3], (H,), jnp.float32, -s2, s2)
    w3 = jax.random.uniform(ks[4], (H, 1), jnp.float32, -s2, s2)
    b3 = jax.random.uniform(ks[5], (), jnp.float32, -s2, s2)
    return (w1, b1, w2, b2, w3, b3)


def _reference(batch_h, batch_r, batch_t, raw, bf16_act):
    """Pure-JAX reference mirroring the kernel's precision policy."""
    w1, b1, w2, b2, w3, b3 = raw
    x = jnp.concatenate([batch_h, batch_r, batch_t], axis=1).astype(jnp.bfloat16)
    z1 = jnp.dot(x, w1.astype(jnp.bfloat16),
                 preferred_element_type=jnp.float32) + b1
    x1 = jnp.tanh(z1.astype(jnp.bfloat16)) if bf16_act else \
        jnp.tanh(z1).astype(jnp.bfloat16)
    z2 = jnp.dot(x1, w2.astype(jnp.bfloat16),
                 preferred_element_type=jnp.float32) + b2
    x2 = jnp.tanh(z2.astype(jnp.bfloat16)) if bf16_act else \
        jnp.tanh(z2).astype(jnp.bfloat16)
    y = jnp.dot(x2, w3.astype(jnp.bfloat16),
                preferred_element_type=jnp.float32) + b3
    return y.reshape(-1)


if __name__ == "__main__":
    B, E, H = 200, 32, 32          # small shapes; B=200 -> 2 partial-ish tiles
    key = jax.random.PRNGKey(0)
    k_d, k_h, k_r, k_t, k_p = jax.random.split(key, 5)

    batch_d = jax.random.normal(k_d, (B, E), jnp.float32)  # unused, API parity
    batch_h = jax.random.normal(k_h, (B, E), jnp.float32)
    batch_r = jax.random.normal(k_r, (B, E), jnp.float32)
    batch_t = jax.random.normal(k_t, (B, E), jnp.float32)

    raw = init_params(E, H, k_p)
    params = prepare_params(raw, E, H)

    y_hat = candidate_filtering_forward(batch_d, batch_h, batch_r, batch_t,
                                        params, block_b=4096)
    jax.block_until_ready(y_hat)
    assert y_hat.shape == (B,)

    kind = _device_kind()
    bf16_act = ("v6" in kind) or ("v7" in kind)
    ref = _reference(batch_h, batch_r, batch_t, raw, bf16_act)
    max_err = float(jnp.max(jnp.abs(y_hat - ref)))
    assert jnp.allclose(y_hat, ref, atol=2e-2, rtol=2e-2), max_err

    print("KERNEL_OK")
</pallas_src>

<mosaic_0001>
module attributes {stable_mosaic.version = 11 : i64} {
  func.func @_mlp_kernel(%arg0: i32, %arg1: memref<128x32xf32, #tpu.memory_space<vmem>>, %arg2: memref<128x32xf32, #tpu.memory_space<vmem>>, %arg3: memref<128x32xf32, #tpu.memory_space<vmem>>, %arg4: memref<128x128xbf16, #tpu.memory_space<vmem>>, %arg5: memref<1x128xf32, #tpu.memory_space<vmem>>, %arg6: memref<128x128xbf16, #tpu.memory_space<vmem>>, %arg7: memref<1x128xf32, #tpu.memory_space<vmem>>, %arg8: memref<128x1xbf16, #tpu.memory_space<vmem>>, %arg9: memref<1x1xf32, #tpu.memory_space<smem>>, %arg10: memref<128x1xf32, #tpu.memory_space<vmem>>) attributes {dimension_semantics = [#tpu.dimension_semantics<parallel>], iteration_bounds = array<i64: 2>, scalar_prefetch = 0 : i64, scratch_operands = 0 : i64, tpu.core_type = #tpu.core_type<tc>, window_params = [{transform_indices = @transform_0, window_bounds = array<i64: 128, 32>}, {transform_indices = @transform_1, window_bounds = array<i64: 128, 32>}, {transform_indices = @transform_2, window_bounds = array<i64: 128, 32>}, {pipeline_mode = #tpu.pipeline_mode<synchronous>, transform_indices = @transform_3, window_bounds = array<i64: 128, 128>}, {pipeline_mode = #tpu.pipeline_mode<synchronous>, transform_indices = @transform_4, window_bounds = array<i64: 1, 128>}, {pipeline_mode = #tpu.pipeline_mode<synchronous>, transform_indices = @transform_5, window_bounds = array<i64: 128, 128>}, {pipeline_mode = #tpu.pipeline_mode<synchronous>, transform_indices = @transform_6, window_bounds = array<i64: 1, 128>}, {pipeline_mode = #tpu.pipeline_mode<synchronous>, transform_indices = @transform_7, window_bounds = array<i64: 128, 1>}, {transform_indices = @transform_8, window_bounds = array<i64: 1, 1>}, {transform_indices = @transform_9, window_bounds = array<i64: 128, 1>}]} {
    %c0 = arith.constant 0 : index
    %c0_0 = arith.constant 0 : index
    %0 = vector.load %arg1[%c0, %c0_0] : memref<128x32xf32, #tpu.memory_space<vmem>>, vector<128x32xf32>
    %c0_1 = arith.constant 0 : index
    %c0_2 = arith.constant 0 : index
    %1 = vector.load %arg2[%c0_1, %c0_2] : memref<128x32xf32, #tpu.memory_space<vmem>>, vector<128x32xf32>
    %c0_3 = arith.constant 0 : index
    %c0_4 = arith.constant 0 : index
    %2 = vector.load %arg3[%c0_3, %c0_4] : memref<128x32xf32, #tpu.memory_space<vmem>>, vector<128x32xf32>
    %cst = arith.constant 0.000000e+00 : f32
    %3 = vector.broadcast %cst : f32 to vector<128x32xf32>
    %4 = tpu.concatenate %0, %1, %2, %3 in 1 : vector<128x32xf32>, vector<128x32xf32>, vector<128x32xf32>, vector<128x32xf32> -> vector<128x128xf32>
    %5 = arith.truncf %4 : vector<128x128xf32> to vector<128x128xbf16>
    %c0_5 = arith.constant 0 : index
    %c0_6 = arith.constant 0 : index
    %6 = vector.load %arg4[%c0_5, %c0_6] : memref<128x128xbf16, #tpu.memory_space<vmem>>, vector<128x128xbf16>
    %cst_7 = arith.constant dense<0.000000e+00> : vector<128x128xf32>
    %7 = tpu.matmul %5, %6, %cst_7 {dimension_numbers = #tpu.dot_dimension_numbers<[1], [0], [0], [1], [0, 0, 1, 1], [], []>} : vector<128x128xbf16>, vector<128x128xbf16>, vector<128x128xf32> -> vector<128x128xf32>
    %c0_8 = arith.constant 0 : index
    %c0_9 = arith.constant 0 : index
    %8 = vector.load %arg5[%c0_8, %c0_9] : memref<1x128xf32, #tpu.memory_space<vmem>>, vector<1x128xf32>
    %9 = vector.broadcast %8 : vector<1x128xf32> to vector<128x128xf32>
    %10 = arith.addf %7, %9 : vector<128x128xf32>
    %11 = math.tanh %10 : vector<128x128xf32>
    %12 = arith.truncf %11 : vector<128x128xf32> to vector<128x128xbf16>
    %c0_10 = arith.constant 0 : index
    %c0_11 = arith.constant 0 : index
    %13 = vector.load %arg6[%c0_10, %c0_11] : memref<128x128xbf16, #tpu.memory_space<vmem>>, vector<128x128xbf16>
    %cst_12 = arith.constant dense<0.000000e+00> : vector<128x128xf32>
    %14 = tpu.matmul %12, %13, %cst_12 {dimension_numbers = #tpu.dot_dimension_numbers<[1], [0], [0], [1], [0, 0, 1, 1], [], []>} : vector<128x128xbf16>, vector<128x128xbf16>, vector<128x128xf32> -> vector<128x128xf32>
    %c0_13 = arith.constant 0 : index
    %c0_14 = arith.constant 0 : index
    %15 = vector.load %arg7[%c0_13, %c0_14] : memref<1x128xf32, #tpu.memory_space<vmem>>, vector<1x128xf32>
    %16 = vector.broadcast %15 : vector<1x128xf32> to vector<128x128xf32>
    %17 = arith.addf %14, %16 : vector<128x128xf32>
    %18 = math.tanh %17 : vector<128x128xf32>
    %19 = arith.truncf %18 : vector<128x128xf32> to vector<128x128xbf16>
    %c0_15 = arith.constant 0 : index
    %c0_16 = arith.constant 0 : index
    %20 = vector.load %arg8[%c0_15, %c0_16] : memref<128x1xbf16, #tpu.memory_space<vmem>>, vector<128x1xbf16>
    %cst_17 = arith.constant dense<0.000000e+00> : vector<128x1xf32>
    %21 = tpu.matmul %19, %20, %cst_17 {dimension_numbers = #tpu.dot_dimension_numbers<[1], [0], [0], [1], [0, 0, 1, 1], [], []>} : vector<128x128xbf16>, vector<128x1xbf16>, vector<128x1xf32> -> vector<128x1xf32>
    %c0_18 = arith.constant 0 : index
    %c0_19 = arith.constant 0 : index
    %22 = memref.load %arg9[%c0_18, %c0_19] : memref<1x1xf32, #tpu.memory_space<smem>>
    %23 = vector.broadcast %22 : f32 to vector<128x1xf32>
    %24 = arith.addf %21, %23 : vector<128x1xf32>
    %c0_20 = arith.constant 0 : index
    %c0_21 = arith.constant 0 : index
    %25 = vector.load %arg10[%c0_20, %c0_21] : memref<128x1xf32, #tpu.memory_space<vmem>>, vector<128x1xf32>
    tpu.vector_store %arg10[%c0_20, %c0_21], %24 {strides = array<i32>} : memref<128x1xf32, #tpu.memory_space<vmem>>, vector<128x1xf32>,
    return
  }
  func.func @transform_0(%arg0: i32) -> (i32, i32) {
    %c0_i32 = arith.constant 0 : i32
    %c0_i32_0 = arith.constant 0 : i32
    return %arg0, %c0_i32 : i32, i32
  }
  func.func @transform_1(%arg0: i32) -> (i32, i32) {
    %c0_i32 = arith.constant 0 : i32
    %c0_i32_0 = arith.constant 0 : i32
    return %arg0, %c0_i32 : i32, i32
  }
  func.func @transform_2(%arg0: i32) -> (i32, i32) {
    %c0_i32 = arith.constant 0 : i32
    %c0_i32_0 = arith.constant 0 : i32
    return %arg0, %c0_i32 : i32, i32
  }
  func.func @transform_3(%arg0: i32) -> (i32, i32) {
    %c0_i32 = arith.constant 0 : i32
    %c0_i32_0 = arith.constant 0 : i32
    %c0_i32_1 = arith.constant 0 : i32
    return %c0_i32, %c0_i32_0 : i32, i32
  }
  func.func @transform_4(%arg0: i32) -> (i32, i32) {
    %c0_i32 = arith.constant 0 : i32
    %c0_i32_0 = arith.constant 0 : i32
    %c0_i32_1 = arith.constant 0 : i32
    return %c0_i32, %c0_i32_0 : i32, i32
  }
  func.func @transform_5(%arg0: i32) -> (i32, i32) {
    %c0_i32 = arith.constant 0 : i32
    %c0_i32_0 = arith.constant 0 : i32
    %c0_i32_1 = arith.constant 0 : i32
    return %c0_i32, %c0_i32_0 : i32, i32
  }
  func.func @transform_6(%arg0: i32) -> (i32, i32) {
    %c0_i32 = arith.constant 0 : i32
    %c0_i32_0 = arith.constant 0 : i32
    %c0_i32_1 = arith.constant 0 : i32
    return %c0_i32, %c0_i32_0 : i32, i32
  }
  func.func @transform_7(%arg0: i32) -> (i32, i32) {
    %c0_i32 = arith.constant 0 : i32
    %c0_i32_0 = arith.constant 0 : i32
    %c0_i32_1 = arith.constant 0 : i32
    return %c0_i32, %c0_i32_0 : i32, i32
  }
  func.func @transform_8(%arg0: i32) -> (i32, i32) {
    %c0_i32 = arith.constant 0 : i32
    %c0_i32_0 = arith.constant 0 : i32
    %c0_i32_1 = arith.constant 0 : i32
    return %c0_i32, %c0_i32_0 : i32, i32
  }
  func.func @transform_9(%arg0: i32) -> (i32, i32) {
    %c0_i32 = arith.constant 0 : i32
    %c0_i32_0 = arith.constant 0 : i32
    return %arg0, %c0_i32 : i32, i32
  }
}

</mosaic_0001>

<llo_original>
// kernel: _forward.1
$region0: #{_forward.1}
  #allocation0 [shape = 'u32[]', space=smem, size = 0x4, offset = 0x4, fixed_abs, tag = 'smem constant byte address 0x4 - core index']
  #allocation1 [shape = 'u32[144,128]{1,0:T(1,128)}', space=vmem, size = 0x12000, scoped, tag = 'internal scratch']
  #allocation2 [shape = 'f32[1,1]{1,0:T(1,128)S(6)}', space=smem, size = 0x200, scoped, tag = 'scoped memory for _forward.1']
  %s0 = inlined_call_operand.hbm [shape: f32[200,32], index: 0, kind: input, shape index: {}]
  %s1 = inlined_call_operand.hbm [shape: f32[200,32], index: 1, kind: input, shape index: {}]
  %s2 = inlined_call_operand.hbm [shape: f32[200,32], index: 2, kind: input, shape index: {}]
  %s3 = inlined_call_operand.hbm [shape: bf16[128,128], index: 3, kind: input, shape index: {}]
  %s4 = inlined_call_operand.hbm [shape: f32[1,128], index: 4, kind: input, shape index: {}]
  %s5 = inlined_call_operand.hbm [shape: bf16[128,128], index: 5, kind: input, shape index: {}]
  %s6 = inlined_call_operand.hbm [shape: f32[1,128], index: 6, kind: input, shape index: {}]
  %s7 = inlined_call_operand.hbm [shape: bf16[128,1], index: 7, kind: input, shape index: {}]
  %s8 = inlined_call_operand.<no memory space> [shape: f32[1,1], index: 8, kind: input, shape index: {}]
  %s9 = inlined_call_operand.hbm [shape: f32[200,1], index: 9, kind: output, shape index: {}]
  %s10 = sld [smem:[#allocation0]]
  $region101: #{_forward.1} parent=0
    _
  %s12 = ssub.s32 1, %s10
  %s13 = scalar_select 0, %s12, %s10
  %14 = sst [smem:[#allocation2]] %s8
  $region1: #{_forward.1} parent=0
    #allocation3 [shape = 'u8[131072]{0}', space=vmem, size = 0x20000, scoped, tag = 'input window, operand 0']
    #allocation4 [shape = 's32[2]{0}', space=sflag, size = 0x8, scoped, tag = 'scoped memory for _forward.1']
    #allocation5 [shape = 's32[2]{0}', space=sflag, size = 0x8, scoped, tag = 'scoped memory for _forward.1']
    #allocation6 [shape = 'u8[131072]{0}', space=vmem, size = 0x20000, scoped, tag = 'input window, operand 1']
    #allocation7 [shape = 's32[2]{0}', space=sflag, size = 0x8, scoped, tag = 'scoped memory for _forward.1']
    #allocation8 [shape = 'u8[131072]{0}', space=vmem, size = 0x20000, scoped, tag = 'input window, operand 2']
    #allocation9 [shape = 'u8[32768]{0}', space=vmem, size = 0x8000, scoped, tag = 'input window, operand 3, single buffered']
    #allocation10 [shape = 's32[1]{0}', space=sflag, size = 0x4, scoped, tag = 'scoped memory for _forward.1']
    #allocation11 [shape = 'u8[512]{0}', space=vmem, size = 0x400, scoped, tag = 'input window, operand 4, single buffered']
    #allocation12 [shape = 'u8[32768]{0}', space=vmem, size = 0x8000, scoped, tag = 'input window, operand 5, single buffered']
    #allocation13 [shape = 's32[1]{0}', space=sflag, size = 0x4, scoped, tag = 'scoped memory for _forward.1']
    #allocation14 [shape = 'u8[512]{0}', space=vmem, size = 0x400, scoped, tag = 'input window, operand 6, single buffered']
    #allocation15 [shape = 'u8[32768]{0}', space=vmem, size = 0x8000, scoped, tag = 'input window, operand 7, single buffered']
    #allocation16 [shape = 's32[1]{0}', space=sflag, size = 0x4, scoped, tag = 'scoped memory for _forward.1']
    #allocation17 [shape = 'u8[131072]{0}', space=vmem, size = 0x20000, scoped, tag = 'output window, operand 0']
    %15 = vsyncpa [#allocation4], 0
    %s16 = scalar_lea.sflag [#allocation4], 1
    %17 = vsyncpa %s16, 0
    %18 = vsyncpa [#allocation7], 0
    %s19 = scalar_lea.sflag [#allocation7], 1
    %20 = vsyncpa %s19, 0
    %21 = vsyncpa [#allocation10], 0
    %22 = vsyncpa [#allocation13], 0
    %23 = vsyncpa [#allocation16], 0
    %24 = vsyncpa [#allocation5], 0
    %s25 = scalar_lea.sflag [#allocation5], 1
    %26 = vsyncpa %s25, 0
    loop: start=0, step=1, limit=4
    $region2: #{_forward.1} parent=1 // loop_pre_header
      _
    $region3: #{_forward.1} parent=1 // loop_header
      %s28 = sphi 0, %s32
      %p29 = scmp.ge.s32.totalorder %s28, 4
      %s38 = sphi 0, %s40
      %s41 = sphi 0, %s38
      %s42 = sphi 0, %s41
      %s58 = sphi 0, %s42
      %s64 = sphi 0, %s66
      %s67 = sphi 0, %s64
      %s68 = sphi 0, %s67
      %s84 = sphi 0, %s68
      %s90 = sphi 0, %s92
      %s93 = sphi 0, %s90
      %s94 = sphi 0, %s93
      %s110 = sphi 0, %s94
      %s114 = sphi 0, %s114
      %s116 = sphi 0, %s114
      %s117 = sphi 0, %s116
      %s131 = sphi 0, %s117
      %s135 = sphi 0, %s135
      %s137 = sphi 0, %s135
      %s138 = sphi 0, %s137
      %s152 = sphi 0, %s138
      %s156 = sphi 0, %s156
      %s158 = sphi 0, %s156
      %s159 = sphi 0, %s158
      %s173 = sphi 0, %s159
      %s177 = sphi 0, %s177
      %s179 = sphi 0, %s177
      %s180 = sphi 0, %s179
      %s194 = sphi 0, %s180
      %s198 = sphi 0, %s198
      %s200 = sphi 0, %s198
      %s201 = sphi 0, %s200
      %s215 = sphi 0, %s201
      %s219 = sphi 0, %s219
      %s221 = sphi 0, %s219
      %s222 = sphi 0, %s221
      %s236 = sphi 0, %s222
      %s242 = sphi 0, %s244
      %s245 = sphi 0, %s242
      %s246 = sphi 0, %s245
      %s262 = sphi 0, %s246
    $region4: #{_forward.1} parent=1 // loop_header_branch
      %31 = sbr.rel (%p29) target = $region8
    $region5: #{_forward.1} parent=1 // loop_body
      %s33 = ssub.s32 %s28, 1
      %s34 = ssub.s32 %s28, 2
      %s35 = sadd.s32 %s28, 1
      %s36 = ssub.s32 %s28, %s35
      %p37 = scmp.eq.s32.totalorder %s36, 0
      %s39 = sadd.s32 %s38, 1
      %s40 = scalar_select %p37, %s38, %s39
      %p43 = pneg %p37
      %p44 = scmp.eq.s32.totalorder %s28, 1
      %p45 = por %p43, %p44
      %p46 = scmp.ne.s32.totalorder %s38, %s41
      %p47 = scmp.eq.s32.totalorder %s28, 0
      %p48 = por %p46, %p47
      %p49 = scmp.ne.s32.totalorder %s38, %s41
      %p50 = scmp.eq.s32.totalorder %s33, 1
      %p51 = por %p49, %p50
      %p52 = scmp.ne.s32.totalorder %s41, %s42
      %p53 = scmp.eq.s32.totalorder %s33, 0
      %p54 = por %p52, %p53
      %p55 = scmp.ne.s32.totalorder %s41, %s42
      %p56 = scmp.eq.s32.totalorder %s34, 1
      %p57 = por %p55, %p56
      %p59 = scmp.ne.s32.totalorder %s42, %s58
      %p60 = scmp.eq.s32.totalorder %s34, 0
      %p61 = por %p59, %p60
      %s62 = ssub.s32 %s28, %s35
      %p63 = scmp.eq.s32.totalorder %s62, 0
      %s65 = sadd.s32 %s64, 1
      %s66 = scalar_select %p63, %s64, %s65
      %p69 = pneg %p63
      %p70 = scmp.eq.s32.totalorder %s28, 1
      %p71 = por %p69, %p70
      %p72 = scmp.ne.s32.totalorder %s64, %s67
      %p73 = scmp.eq.s32.totalorder %s28, 0
      %p74 = por %p72, %p73
      %p75 = scmp.ne.s32.totalorder %s64, %s67
      %p76 = scmp.eq.s32.totalorder %s33, 1
      %p77 = por %p75, %p76
      %p78 = scmp.ne.s32.totalorder %s67, %s68
      %p79 = scmp.eq.s32.totalorder %s33, 0
      %p80 = por %p78, %p79
      %p81 = scmp.ne.s32.totalorder %s67, %s68
      %p82 = scmp.eq.s32.totalorder %s34, 1
      %p83 = por %p81, %p82
      %p85 = scmp.ne.s32.totalorder %s68, %s84
      %p86 = scmp.eq.s32.totalorder %s34, 0
      %p87 = por %p85, %p86
      %s88 = ssub.s32 %s28, %s35
      %p89 = scmp.eq.s32.totalorder %s88, 0
      %s91 = sadd.s32 %s90, 1
      %s92 = scalar_select %p89, %s90, %s91
      %p95 = pneg %p89
      %p96 = scmp.eq.s32.totalorder %s28, 1
      %p97 = por %p95, %p96
      %p98 = scmp.ne.s32.totalorder %s90, %s93
      %p99 = scmp.eq.s32.totalorder %s28, 0
      %p100 = por %p98, %p99
      %p101 = scmp.ne.s32.totalorder %s90, %s93
      %p102 = scmp.eq.s32.totalorder %s33, 1
      %p103 = por %p101, %p102
      %p104 = scmp.ne.s32.totalorder %s93, %s94
      %p105 = scmp.eq.s32.totalorder %s33, 0
      %p106 = por %p104, %p105
      %p107 = scmp.ne.s32.totalorder %s93, %s94
      %p108 = scmp.eq.s32.totalorder %s34, 1
      %p109 = por %p107, %p108
      %p111 = scmp.ne.s32.totalorder %s94, %s110
      %p112 = scmp.eq.s32.totalorder %s34, 0
      %p113 = por %p111, %p112
      %s115 = sadd.s32 %s114, 1
      %p118 = scmp.eq.s32.totalorder %s28, 1
      %p119 = scmp.ne.s32.totalorder %s114, %s116
      %p120 = scmp.eq.s32.totalorder %s28, 0
      %p121 = por %p119, %p120
      %p122 = scmp.ne.s32.totalorder %s114, %s116
      %p123 = scmp.eq.s32.totalorder %s33, 1
      %p124 = por %p122, %p123
      %p125 = scmp.ne.s32.totalorder %s116, %s117
      %p126 = scmp.eq.s32.totalorder %s33, 0
      %p127 = por %p125, %p126
      %p128 = scmp.ne.s32.totalorder %s116, %s117
      %p129 = scmp.eq.s32.totalorder %s34, 1
      %p130 = por %p128, %p129
      %p132 = scmp.ne.s32.totalorder %s117, %s131
      %p133 = scmp.eq.s32.totalorder %s34, 0
      %p134 = por %p132, %p133
      %s136 = sadd.s32 %s135, 1
      %p139 = scmp.eq.s32.totalorder %s28, 1
      %p140 = scmp.ne.s32.totalorder %s135, %s137
      %p141 = scmp.eq.s32.totalorder %s28, 0
      %p142 = por %p140, %p141
      %p143 = scmp.ne.s32.totalorder %s135, %s137
      %p144 = scmp.eq.s32.totalorder %s33, 1
      %p145 = por %p143, %p144
      %p146 = scmp.ne.s32.totalorder %s137, %s138
      %p147 = scmp.eq.s32.totalorder %s33, 0
      %p148 = por %p146, %p147
      %p149 = scmp.ne.s32.totalorder %s137, %s138
      %p150 = scmp.eq.s32.totalorder %s34, 1
      %p151 = por %p149, %p150
      %p153 = scmp.ne.s32.totalorder %s138, %s152
      %p154 = scmp.eq.s32.totalorder %s34, 0
      %p155 = por %p153, %p154
      %s157 = sadd.s32 %s156, 1
      %p160 = scmp.eq.s32.totalorder %s28, 1
      %p161 = scmp.ne.s32.totalorder %s156, %s158
      %p162 = scmp.eq.s32.totalorder %s28, 0
      %p163 = por %p161, %p162
      %p164 = scmp.ne.s32.totalorder %s156, %s158
      %p165 = scmp.eq.s32.totalorder %s33, 1
      %p166 = por %p164, %p165
      %p167 = scmp.ne.s32.totalorder %s158, %s159
      %p168 = scmp.eq.s32.totalorder %s33, 0
      %p169 = por %p167, %p168
      %p170 = scmp.ne.s32.totalorder %s158, %s159
      %p171 = scmp.eq.s32.totalorder %s34, 1
      %p172 = por %p170, %p171
      %p174 = scmp.ne.s32.totalorder %s159, %s173
      %p175 = scmp.eq.s32.totalorder %s34, 0
      %p176 = por %p174, %p175
      %s178 = sadd.s32 %s177, 1
      %p181 = scmp.eq.s32.totalorder %s28, 1
      %p182 = scmp.ne.s32.totalorder %s177, %s179
      %p183 = scmp.eq.s32.totalorder %s28, 0
      %p184 = por %p182, %p183
      %p185 = scmp.ne.s32.totalorder %s177, %s179
      %p186 = scmp.eq.s32.totalorder %s33, 1
      %p187 = por %p185, %p186
      %p188 = scmp.ne.s32.totalorder %s179, %s180
      %p189 = scmp.eq.s32.totalorder %s33, 0
      %p190 = por %p188, %p189
      %p191 = scmp.ne.s32.totalorder %s179, %s180
      %p192 = scmp.eq.s32.totalorder %s34, 1
      %p193 = por %p191, %p192
      %p195 = scmp.ne.s32.totalorder %s180, %s194
      %p196 = scmp.eq.s32.totalorder %s34, 0
      %p197 = por %p195, %p196
      %s199 = sadd.s32 %s198, 1
      %p202 = scmp.eq.s32.totalorder %s28, 1
      %p203 = scmp.ne.s32.totalorder %s198, %s200
      %p204 = scmp.eq.s32.totalorder %s28, 0
      %p205 = por %p203, %p204
      %p206 = scmp.ne.s32.totalorder %s198, %s200
      %p207 = scmp.eq.s32.totalorder %s33, 1
      %p208 = por %p206, %p207
      %p209 = scmp.ne.s32.totalorder %s200, %s201
      %p210 = scmp.eq.s32.totalorder %s33, 0
      %p211 = por %p209, %p210
      %p212 = scmp.ne.s32.totalorder %s200, %s201
      %p213 = scmp.eq.s32.totalorder %s34, 1
      %p214 = por %p212, %p213
      %p216 = scmp.ne.s32.totalorder %s201, %s215
      %p217 = scmp.eq.s32.totalorder %s34, 0
      %p218 = por %p216, %p217
      %s220 = sadd.s32 %s219, 1
      %p223 = scmp.eq.s32.totalorder %s28, 1
      %p224 = scmp.ne.s32.totalorder %s219, %s221
      %p225 = scmp.eq.s32.totalorder %s28, 0
      %p226 = por %p224, %p225
      %p227 = scmp.ne.s32.totalorder %s219, %s221
      %p228 = scmp.eq.s32.totalorder %s33, 1
      %p229 = por %p227, %p228
      %p230 = scmp.ne.s32.totalorder %s221, %s222
      %p231 = scmp.eq.s32.totalorder %s33, 0
      %p232 = por %p230, %p231
      %p233 = scmp.ne.s32.totalorder %s221, %s222
      %p234 = scmp.eq.s32.totalorder %s34, 1
      %p235 = por %p233, %p234
      %p237 = scmp.ne.s32.totalorder %s222, %s236
      %p238 = scmp.eq.s32.totalorder %s34, 0
      %p239 = por %p237, %p238
      %s240 = ssub.s32 %s28, %s35
      %p241 = scmp.eq.s32.totalorder %s240, 0
      %s243 = sadd.s32 %s242, 1
      %s244 = scalar_select %p241, %s242, %s243
      %p247 = pneg %p241
      %p248 = scmp.eq.s32.totalorder %s28, 1
      %p249 = por %p247, %p248
      %p250 = scmp.ne.s32.totalorder %s242, %s245
      %p251 = scmp.eq.s32.totalorder %s28, 0
      %p252 = por %p250, %p251
      %p253 = scmp.ne.s32.totalorder %s242, %s245
      %p254 = scmp.eq.s32.totalorder %s33, 1
      %p255 = por %p253, %p254
      %p256 = scmp.ne.s32.totalorder %s245, %s246
      %p257 = scmp.eq.s32.totalorder %s33, 0
      %p258 = por %p256, %p257
      %p259 = scmp.ne.s32.totalorder %s245, %s246
      %p260 = scmp.eq.s32.totalorder %s34, 1
      %p261 = por %p259, %p260
      %p263 = scmp.ne.s32.totalorder %s246, %s262
      %p264 = scmp.eq.s32.totalorder %s34, 0
      %p265 = por %p263, %p264
      %p266 = scmp.le.s32.totalorder 1, %s28
      %p267 = scmp.lt.s32.totalorder %s28, 3
      %p268 = pnand %p266, %p267
      %p269 = pneg %p268
      // Predicated region
      $region9: #{_forward.1} parent=5 // pred_check
        _
      $region10: #{_forward.1} parent=5 // pred_check_branch
        %271 = sbr.rel (%p268) target = $region12
      $region11: #{_forward.1} parent=5 // pred_region
        %s272 = ssub.s32 %s28, 1
        // Predicated region
        $region13: #{_forward.1} parent=11 // pred_check
          %p273 = pneg %p127
        $region14: #{_forward.1} parent=11 // pred_check_branch
          %275 = sbr.rel (%p273) target = $region16
        $region15: #{_forward.1} parent=11 // pred_region
          %s277 = ssub.s32 1024, 1024
          %278 = vsyncadd [#allocation10], %s277
          %s279 = sshll.u32 [#allocation9], 4
          %s280 = int_to_ptr.vmem [resolvable:$true] %s279
          %285 = dma.hbm_to_vmem [thread:$0]  %s3, 1024, %s280, [#allocation10], 64, 64, 4
        $region16: #{_forward.1} parent=11 // pred_fallthru
          _
        // Predicated region
        $region17: #{_forward.1} parent=11 // pred_check
          %p286 = pneg %p148
        $region18: #{_forward.1} parent=11 // pred_check_branch
          %288 = sbr.rel (%p286) target = $region20
        $region19: #{_forward.1} parent=11 // pred_region
          %s290 = ssub.s32 16, 16
          %291 = vsyncadd [#allocation10], %s290
          %s293 = sshll.u32 [#allocation11], 4
          %s294 = int_to_ptr.vmem [resolvable:$true] %s293
          %296 = dma.hbm_to_vmem [thread:$0]  %s4, 16, %s294, [#allocation10]
        $region20: #{_forward.1} parent=11 // pred_fallthru
          _
        // Predicated region
        $region21: #{_forward.1} parent=11 // pred_check
          %p297 = pneg %p169
        $region22: #{_forward.1} parent=11 // pred_check_branch
          %299 = sbr.rel (%p297) target = $region24
        $region23: #{_forward.1} parent=11 // pred_region
          %s301 = ssub.s32 1024, 1024
          %302 = vsyncadd [#allocation13], %s301
          %s303 = sshll.u32 [#allocation12], 4
          %s304 = int_to_ptr.vmem [resolvable:$true] %s303
          %309 = dma.hbm_to_vmem [thread:$0]  %s5, 1024, %s304, [#allocation13], 64, 64, 4
        $region24: #{_forward.1} parent=11 // pred_fallthru
          _
        // Predicated region
        $region25: #{_forward.1} parent=11 // pred_check
          %p310 = pneg %p190
        $region26: #{_forward.1} parent=11 // pred_check_branch
          %312 = sbr.rel (%p310) target = $region28
        $region27: #{_forward.1} parent=11 // pred_region
          %s314 = ssub.s32 16, 16
          %315 = vsyncadd [#allocation13], %s314
          %s317 = sshll.u32 [#allocation14], 4
          %s318 = int_to_ptr.vmem [resolvable:$true] %s317
          %320 = dma.hbm_to_vmem [thread:$0]  %s6, 16, %s318, [#allocation13]
        $region28: #{_forward.1} parent=11 // pred_fallthru
          _
        // Predicated region
        $region29: #{_forward.1} parent=11 // pred_check
          %p321 = pneg %p211
        $region30: #{_forward.1} parent=11 // pred_check_branch
          %323 = sbr.rel (%p321) target = $region32
        $region31: #{_forward.1} parent=11 // pred_region
          %s325 = ssub.s32 1024, 1024
          %326 = vsyncadd [#allocation16], %s325
          %s327 = sshll.u32 [#allocation15], 4
          %s328 = int_to_ptr.vmem [resolvable:$true] %s327
          %333 = dma.hbm_to_vmem [thread:$0]  %s7, 1024, %s328, [#allocation16], 64, 64, 4
        $region32: #{_forward.1} parent=11 // pred_fallthru
          _
        // Predicated region
        $region33: #{_forward.1} parent=11 // pred_check
          %p334 = pneg %p232
        $region34: #{_forward.1} parent=11 // pred_check_branch
          %336 = sbr.rel (%p334) target = $region36
        $region35: #{_forward.1} parent=11 // pred_region
          _
        $region36: #{_forward.1} parent=11 // pred_fallthru
          _
      $region12: #{_forward.1} parent=5 // pred_fallthru
        _
      %p337 = scmp.lt.s32.totalorder %s28, 2
      // Predicated region
      $region37: #{_forward.1} parent=5 // pred_check
        %p338 = pneg %p337
      $region38: #{_forward.1} parent=5 // pred_check_branch
        %340 = sbr.rel (%p338) target = $region40
      $region39: #{_forward.1} parent=5 // pred_region
        // Predicated region
        $region41: #{_forward.1} parent=39 // pred_check
          %p341 = pneg %p48
        $region42: #{_forward.1} parent=39 // pred_check_branch
          %343 = sbr.rel (%p341) target = $region44
        $region43: #{_forward.1} parent=39 // pred_region
          %s344 = sand.u32 %s38, 1
          %s345 = scalar_lea.sflag [#allocation4], %s344
          %s346 = sand.u32 %s38, 1
          %s347 = smul.addr %s346, 128
          %s348 = scalar_lea.vmem [#allocation3], %s347
          %s349 = smul.u32 16, %s28
          %s350 = ssub.s32 25, %s349
          %p351 = scmp.lt.s32.totalorder %s350, 16
          %s352 = scalar_select %p351, %s350, 16
          %s353 = smul.u32 128, %s352
          %s355 = ssub.s32 2048, %s353
          %356 = vsyncadd %s345, %s355
          %p357 = scmp.ne.s32.totalorder 0, %s353
          %s358 = smul.addr %s349, 128
          %s359 = scalar_lea.hbm %s0, %s358
          %s360 = smul.u32 8, %s352
          %s361 = sshll.u32 %s348, 4
          %s362 = int_to_ptr.vmem [resolvable:$true] %s361
          %s363 = sshll.u32 %s360, 4
          %367 = dma.hbm_to_vmem [thread:$0]  (%p357), %s359, %s363, %s362, %s345, 128, 128, 8
        $region44: #{_forward.1} parent=39 // pred_fallthru
          _
        // Predicated region
        $region45: #{_forward.1} parent=39 // pred_check
          %p368 = pneg %p74
        $region46: #{_forward.1} parent=39 // pred_check_branch
          %370 = sbr.rel (%p368) target = $region48
        $region47: #{_forward.1} parent=39 // pred_region
          %s371 = sand.u32 %s28, 1
          %s372 = scalar_lea.sflag [#allocation7], %s371
          %s373 = sand.u32 %s64, 1
          %s374 = smul.addr %s373, 128
          %s375 = scalar_lea.vmem [#allocation6], %s374
          %s376 = smul.u32 16, %s28
          %s377 = ssub.s32 25, %s376
          %p378 = scmp.lt.s32.totalorder %s377, 16
          %s379 = scalar_select %p378, %s377, 16
          %s380 = smul.u32 128, %s379
          %s382 = ssub.s32 2048, %s380
          %383 = vsyncadd %s372, %s382
          %p384 = scmp.ne.s32.totalorder 0, %s380
          %s385 = smul.addr %s376, 128
          %s386 = scalar_lea.hbm %s1, %s385
          %s387 = smul.u32 8, %s379
          %s388 = sshll.u32 %s375, 4
          %s389 = int_to_ptr.vmem [resolvable:$true] %s388
          %s390 = sshll.u32 %s387, 4
          %394 = dma.hbm_to_vmem [thread:$0]  (%p384), %s386, %s390, %s389, %s372, 128, 128, 8
        $region48: #{_forward.1} parent=39 // pred_fallthru
          _
        // Predicated region
        $region49: #{_forward.1} parent=39 // pred_check
          %p395 = pneg %p100
        $region50: #{_forward.1} parent=39 // pred_check_branch
          %397 = sbr.rel (%p395) target = $region52
        $region51: #{_forward.1} parent=39 // pred_region
          %s398 = sand.u32 %s28, 1
          %s399 = scalar_lea.sflag [#allocation7], %s398
          %s400 = sand.u32 %s90, 1
          %s401 = smul.addr %s400, 128
          %s402 = scalar_lea.vmem [#allocation8], %s401
          %s403 = smul.u32 16, %s28
          %s404 = ssub.s32 25, %s403
          %p405 = scmp.lt.s32.totalorder %s404, 16
          %s406 = scalar_select %p405, %s404, 16
          %s407 = smul.u32 128, %s406
          %s409 = ssub.s32 2048, %s407
          %410 = vsyncadd %s399, %s409
          %p411 = scmp.ne.s32.totalorder 0, %s407
          %s412 = smul.addr %s403, 128
          %s413 = scalar_lea.hbm %s2, %s412
          %s414 = smul.u32 8, %s406
          %s415 = sshll.u32 %s402, 4
          %s416 = int_to_ptr.vmem [resolvable:$true] %s415
          %s417 = sshll.u32 %s414, 4
          %421 = dma.hbm_to_vmem [thread:$0]  (%p411), %s413, %s417, %s416, %s399, 128, 128, 8
        $region52: #{_forward.1} parent=39 // pred_fallthru
          _
      $region40: #{_forward.1} parent=5 // pred_fallthru
        _
      %p422 = scmp.le.s32.totalorder 1, %s28
      %p423 = scmp.lt.s32.totalorder %s28, 3
      %p424 = pnand %p422, %p423
      %p425 = pneg %p424
      // Predicated region
      $region53: #{_forward.1} parent=5 // pred_check
        _
      $region54: #{_forward.1} parent=5 // pred_check_branch
        %427 = sbr.rel (%p424) target = $region56
      $region55: #{_forward.1} parent=5 // pred_region
        %s428 = ssub.s32 %s28, 1
        %s429 = sand.u32 %s41, 1
        %s430 = scalar_lea.sflag [#allocation4], %s429
        %s431 = sand.u32 %s41, 1
        %s432 = smul.addr %s431, 128
        %s433 = scalar_lea.vmem [#allocation3], %s432
        // Predicated region
        $region57: #{_forward.1} parent=55 // pred_check
          %p434 = pneg %p54
        $region58: #{_forward.1} parent=55 // pred_check_branch
          %436 = sbr.rel (%p434) target = $region60
        $region59: #{_forward.1} parent=55 // pred_region
          %437 = dma.done %s430, 2048
        $region60: #{_forward.1} parent=55 // pred_fallthru
          _
        %s438 = sand.u32 %s33, 1
        %s439 = scalar_lea.sflag [#allocation7], %s438
        %s440 = sand.u32 %s67, 1
        %s441 = smul.addr %s440, 128
        %s442 = scalar_lea.vmem [#allocation6], %s441
        // Predicated region
        $region61: #{_forward.1} parent=55 // pred_check
          %p443 = pneg %p80
        $region62: #{_forward.1} parent=55 // pred_check_branch
          %445 = sbr.rel (%p443) target = $region64
        $region63: #{_forward.1} parent=55 // pred_region
          %446 = dma.done %s439, 2048
        $region64: #{_forward.1} parent=55 // pred_fallthru
          _
        %s447 = sand.u32 %s33, 1
        %s448 = scalar_lea.sflag [#allocation7], %s447
        %s449 = sand.u32 %s93, 1
        %s450 = smul.addr %s449, 128
        %s451 = scalar_lea.vmem [#allocation8], %s450
        // Predicated region
        $region65: #{_forward.1} parent=55 // pred_check
          %p452 = pneg %p106
        $region66: #{_forward.1} parent=55 // pred_check_branch
          %454 = sbr.rel (%p452) target = $region68
        $region67: #{_forward.1} parent=55 // pred_region
          %455 = dma.done %s448, 2048
        $region68: #{_forward.1} parent=55 // pred_fallthru
          _
        // Predicated region
        $region69: #{_forward.1} parent=55 // pred_check
          %p456 = pneg %p127
        $region70: #{_forward.1} parent=55 // pred_check_branch
          %458 = sbr.rel (%p456) target = $region72
        $region71: #{_forward.1} parent=55 // pred_region
          %459 = dma.done [#allocation10], 1024
        $region72: #{_forward.1} parent=55 // pred_fallthru
          _
        // Predicated region
        $region73: #{_forward.1} parent=55 // pred_check
          %p460 = pneg %p148
        $region74: #{_forward.1} parent=55 // pred_check_branch
          %462 = sbr.rel (%p460) target = $region76
        $region75: #{_forward.1} parent=55 // pred_region
          %463 = dma.done [#allocation10], 16
        $region76: #{_forward.1} parent=55 // pred_fallthru
          _
        // Predicated region
        $region77: #{_forward.1} parent=55 // pred_check
          %p464 = pneg %p169
        $region78: #{_forward.1} parent=55 // pred_check_branch
          %466 = sbr.rel (%p464) target = $region80
        $region79: #{_forward.1} parent=55 // pred_region
          %467 = dma.done [#allocation13], 1024
        $region80: #{_forward.1} parent=55 // pred_fallthru
          _
        // Predicated region
        $region81: #{_forward.1} parent=55 // pred_check
          %p468 = pneg %p190
        $region82: #{_forward.1} parent=55 // pred_check_branch
          %470 = sbr.rel (%p468) target = $region84
        $region83: #{_forward.1} parent=55 // pred_region
          %471 = dma.done [#allocation13], 16
        $region84: #{_forward.1} parent=55 // pred_fallthru
          _
        // Predicated region
        $region85: #{_forward.1} parent=55 // pred_check
          %p472 = pneg %p211
        $region86: #{_forward.1} parent=55 // pred_check_branch
          %474 = sbr.rel (%p472) target = $region88
        $region87: #{_forward.1} parent=55 // pred_region
          %475 = dma.done [#allocation16], 1024
        $region88: #{_forward.1} parent=55 // pred_fallthru
          _
        %s476 = sand.u32 %s41, 1
        %s477 = scalar_lea.sflag [#allocation4], %s476
        %s478 = sand.u32 %s41, 1
        %s479 = smul.addr %s478, 128
        %s480 = scalar_lea.vmem [#allocation3], %s479
        %p481 = pneg %p54
        %p482 = pneg %p51
        %s483 = sand.u32 %s33, 1
        %s484 = scalar_lea.sflag [#allocation7], %s483
        %s485 = sand.u32 %s67, 1
        %s486 = smul.addr %s485, 128
        %s487 = scalar_lea.vmem [#allocation6], %s486
        %p488 = pneg %p80
        %p489 = pneg %p77
        %s490 = sand.u32 %s33, 1
        %s491 = scalar_lea.sflag [#allocation7], %s490
        %s492 = sand.u32 %s93, 1
        %s493 = smul.addr %s492, 128
        %s494 = scalar_lea.vmem [#allocation8], %s493
        %p495 = pneg %p106
        %p496 = pneg %p103
        %p497 = pneg %p127
        %p498 = pneg %p124
        %p499 = pneg %p148
        %p500 = pneg %p145
        %p501 = pneg %p169
        %p502 = pneg %p166
        %p503 = pneg %p190
        %p504 = pneg %p187
        %p505 = pneg %p211
        %p506 = pneg %p208
        %p507 = pneg %p232
        %p508 = pneg %p229
        %p509 = pneg %p258
        %p510 = pneg %p255
        %s511 = sand.u32 %s245, 1
        %s512 = scalar_lea.sflag [#allocation5], %s511
        %s513 = sand.u32 %s245, 1
        %s514 = smul.addr %s513, 128
        %s515 = scalar_lea.vmem [#allocation17], %s514
        %s516 = smul.u32 16, %s33
        %s517 = ssub.s32 25, %s516
        %p518 = scmp.lt.s32.totalorder %s517, 16
        %s519 = scalar_select %p518, %s517, 16
        %s520 = smul.u32 128, %s519
        %s521 = smul.u32 16, %s33
        %s522 = ssub.s32 25, %s521
        %p523 = scmp.lt.s32.totalorder %s522, 16
        %s524 = scalar_select %p523, %s522, 16
        %s525 = smul.u32 128, %s524
        %s526 = smul.u32 16, %s33
        %s527 = ssub.s32 25, %s526
        %p528 = scmp.lt.s32.totalorder %s527, 16
        %s529 = scalar_select %p528, %s527, 16
        %s530 = smul.u32 128, %s529
        %s531 = smul.u32 16, %s33
        %s532 = ssub.s32 25, %s531
        %p533 = scmp.lt.s32.totalorder %s532, 16
        %s534 = scalar_select %p533, %s532, 16
        %s535 = smul.u32 128, %s534
        %v537 = vld [vmem:[%s433] sm:$0xff]
        %v538 = vld [vmem:[%s433 + $0x8] sm:$0xff]
        %v539 = vld [vmem:[%s433 + $0x10] sm:$0xff]
        %v540 = vld [vmem:[%s433 + $0x18] sm:$0xff]
        %v541 = vld [vmem:[%s433 + $0x20] sm:$0xff]
        %v542 = vld [vmem:[%s433 + $0x28] sm:$0xff]
        %v543 = vld [vmem:[%s433 + $0x30] sm:$0xff]
        %v544 = vld [vmem:[%s433 + $0x38] sm:$0xff]
        %v545 = vld [vmem:[%s433 + $0x40] sm:$0xff]
        %v546 = vld [vmem:[%s433 + $0x48] sm:$0xff]
        %v547 = vld [vmem:[%s433 + $0x50] sm:$0xff]
        %v548 = vld [vmem:[%s433 + $0x58] sm:$0xff]
        %v549 = vld [vmem:[%s433 + $0x60] sm:$0xff]
        %v550 = vld [vmem:[%s433 + $0x68] sm:$0xff]
        %v551 = vld [vmem:[%s433 + $0x70] sm:$0xff]
        %v552 = vld [vmem:[%s433 + $0x78] sm:$0xff]
        %v553 = vld [vmem:[%s442] sm:$0xff]
        %v554 = vld [vmem:[%s442 + $0x8] sm:$0xff]
        %v555 = vld [vmem:[%s442 + $0x10] sm:$0xff]
        %v556 = vld [vmem:[%s442 + $0x18] sm:$0xff]
        %v557 = vld [vmem:[%s442 + $0x20] sm:$0xff]
        %v558 = vld [vmem:[%s442 + $0x28] sm:$0xff]
        %v559 = vld [vmem:[%s442 + $0x30] sm:$0xff]
        %v560 = vld [vmem:[%s442 + $0x38] sm:$0xff]
        %v561 = vld [vmem:[%s442 + $0x40] sm:$0xff]
        %v562 = vld [vmem:[%s442 + $0x48] sm:$0xff]
        %v563 = vld [vmem:[%s442 + $0x50] sm:$0xff]
        %v564 = vld [vmem:[%s442 + $0x58] sm:$0xff]
        %v565 = vld [vmem:[%s442 + $0x60] sm:$0xff]
        %v566 = vld [vmem:[%s442 + $0x68] sm:$0xff]
        %v567 = vld [vmem:[%s442 + $0x70] sm:$0xff]
        %v568 = vld [vmem:[%s442 + $0x78] sm:$0xff]
        %v569 = vld [vmem:[%s451] sm:$0xff]
        %v570 = vld [vmem:[%s451 + $0x8] sm:$0xff]
        %v571 = vld [vmem:[%s451 + $0x10] sm:$0xff]
        %v572 = vld [vmem:[%s451 + $0x18] sm:$0xff]
        %v573 = vld [vmem:[%s451 + $0x20] sm:$0xff]
        %v574 = vld [vmem:[%s451 + $0x28] sm:$0xff]
        %v575 = vld [vmem:[%s451 + $0x30] sm:$0xff]
        %v576 = vld [vmem:[%s451 + $0x38] sm:$0xff]
        %v577 = vld [vmem:[%s451 + $0x40] sm:$0xff]
        %v578 = vld [vmem:[%s451 + $0x48] sm:$0xff]
        %v579 = vld [vmem:[%s451 + $0x50] sm:$0xff]
        %v580 = vld [vmem:[%s451 + $0x58] sm:$0xff]
        %v581 = vld [vmem:[%s451 + $0x60] sm:$0xff]
        %v582 = vld [vmem:[%s451 + $0x68] sm:$0xff]
        %v583 = vld [vmem:[%s451 + $0x70] sm:$0xff]
        %v584 = vld [vmem:[%s451 + $0x78] sm:$0xff]
        %601 = vrot.lane.b32.xlu0 %v553, 32
        %v602 = vpop.permute.xlu0 %601
        %603 = vrot.lane.b32.xlu0 %v554, 32
        %v604 = vpop.permute.xlu0 %603
        %605 = vrot.lane.b32.xlu0 %v555, 32
        %v606 = vpop.permute.xlu0 %605
        %607 = vrot.lane.b32.xlu0 %v556, 32
        %v608 = vpop.permute.xlu0 %607
        %609 = vrot.lane.b32.xlu0 %v557, 32
        %v610 = vpop.permute.xlu0 %609
        %611 = vrot.lane.b32.xlu0 %v558, 32
        %v612 = vpop.permute.xlu0 %611
        %613 = vrot.lane.b32.xlu0 %v559, 32
        %v614 = vpop.permute.xlu0 %613
        %615 = vrot.lane.b32.xlu0 %v560, 32
        %v616 = vpop.permute.xlu0 %615
        %617 = vrot.lane.b32.xlu0 %v561, 32
        %v618 = vpop.permute.xlu0 %617
        %619 = vrot.lane.b32.xlu0 %v562, 32
        %v620 = vpop.permute.xlu0 %619
        %621 = vrot.lane.b32.xlu0 %v563, 32
        %v622 = vpop.permute.xlu0 %621
        %623 = vrot.lane.b32.xlu0 %v564, 32
        %v624 = vpop.permute.xlu0 %623
        %625 = vrot.lane.b32.xlu0 %v565, 32
        %v626 = vpop.permute.xlu0 %625
        %627 = vrot.lane.b32.xlu0 %v566, 32
        %v628 = vpop.permute.xlu0 %627
        %629 = vrot.lane.b32.xlu0 %v567, 32
        %v630 = vpop.permute.xlu0 %629
        %631 = vrot.lane.b32.xlu0 %v568, 32
        %v632 = vpop.permute.xlu0 %631
        %665 = vrot.lane.b32.xlu0 %v569, 64
        %v666 = vpop.permute.xlu0 %665
        %667 = vrot.lane.b32.xlu0 %v570, 64
        %v668 = vpop.permute.xlu0 %667
        %669 = vrot.lane.b32.xlu0 %v571, 64
        %v670 = vpop.permute.xlu0 %669
        %671 = vrot.lane.b32.xlu0 %v572, 64
        %v672 = vpop.permute.xlu0 %671
        %673 = vrot.lane.b32.xlu0 %v573, 64
        %v674 = vpop.permute.xlu0 %673
        %675 = vrot.lane.b32.xlu0 %v574, 64
        %v676 = vpop.permute.xlu0 %675
        %677 = vrot.lane.b32.xlu0 %v575, 64
        %v678 = vpop.permute.xlu0 %677
        %679 = vrot.lane.b32.xlu0 %v576, 64
        %v680 = vpop.permute.xlu0 %679
        %681 = vrot.lane.b32.xlu0 %v577, 64
        %v682 = vpop.permute.xlu0 %681
        %683 = vrot.lane.b32.xlu0 %v578, 64
        %v684 = vpop.permute.xlu0 %683
        %685 = vrot.lane.b32.xlu0 %v579, 64
        %v686 = vpop.permute.xlu0 %685
        %687 = vrot.lane.b32.xlu0 %v580, 64
        %v688 = vpop.permute.xlu0 %687
        %689 = vrot.lane.b32.xlu0 %v581, 64
        %v690 = vpop.permute.xlu0 %689
        %691 = vrot.lane.b32.xlu0 %v582, 64
        %v692 = vpop.permute.xlu0 %691
        %693 = vrot.lane.b32.xlu0 %v583, 64
        %v694 = vpop.permute.xlu0 %693
        %695 = vrot.lane.b32.xlu0 %v584, 64
        %v696 = vpop.permute.xlu0 %695
        %vm713 = vcmask 261120
        %v714 = vsel %vm713, %v537, %v602
        %v715 = vsel %vm713, %v538, %v604
        %v716 = vsel %vm713, %v539, %v606
        %v717 = vsel %vm713, %v540, %v608
        %v718 = vsel %vm713, %v541, %v610
        %v719 = vsel %vm713, %v542, %v612
        %v720 = vsel %vm713, %v543, %v614
        %v721 = vsel %vm713, %v544, %v616
        %v722 = vsel %vm713, %v545, %v618
        %v723 = vsel %vm713, %v546, %v620
        %v724 = vsel %vm713, %v547, %v622
        %v725 = vsel %vm713, %v548, %v624
        %v726 = vsel %vm713, %v549, %v626
        %v727 = vsel %vm713, %v550, %v628
        %v728 = vsel %vm713, %v551, %v630
        %v729 = vsel %vm713, %v552, %v632
        %vm730 = vcmask 523264
        %v731 = vsel %vm730, %v714, %v666
        %v732 = vsel %vm730, %v715, %v668
        %v733 = vsel %vm730, %v716, %v670
        %v734 = vsel %vm730, %v717, %v672
        %v735 = vsel %vm730, %v718, %v674
        %v736 = vsel %vm730, %v719, %v676
        %v737 = vsel %vm730, %v720, %v678
        %v738 = vsel %vm730, %v721, %v680
        %v739 = vsel %vm730, %v722, %v682
        %v740 = vsel %vm730, %v723, %v684
        %v741 = vsel %vm730, %v724, %v686
        %v742 = vsel %vm730, %v725, %v688
        %v743 = vsel %vm730, %v726, %v690
        %v744 = vsel %vm730, %v727, %v692
        %v745 = vsel %vm730, %v728, %v694
        %v746 = vsel %vm730, %v729, %v696
        %vm747 = vcmask 785408
        %v748 = vsel %vm747, %v731, 0.0
        %v749 = vsel %vm747, %v732, 0.0
        %v750 = vsel %vm747, %v733, 0.0
        %v751 = vsel %vm747, %v734, 0.0
        %v752 = vsel %vm747, %v735, 0.0
        %v753 = vsel %vm747, %v736, 0.0
        %v754 = vsel %vm747, %v737, 0.0
        %v755 = vsel %vm747, %v738, 0.0
        %v756 = vsel %vm747, %v739, 0.0
        %v757 = vsel %vm747, %v740, 0.0
        %v758 = vsel %vm747, %v741, 0.0
        %v759 = vsel %vm747, %v742, 0.0
        %v760 = vsel %vm747, %v743, 0.0
        %v761 = vsel %vm747, %v744, 0.0
        %v762 = vsel %vm747, %v745, 0.0
        %v763 = vsel %vm747, %v746, 0.0
        %v764 = vpack.c.bf16 %v749, %v748
        %v765 = vpack.c.bf16 %v751, %v750
        %v766 = vpack.c.bf16 %v753, %v752
        %v767 = vpack.c.bf16 %v755, %v754
        %v768 = vpack.c.bf16 %v757, %v756
        %v769 = vpack.c.bf16 %v759, %v758
        %v770 = vpack.c.bf16 %v761, %v760
        %v771 = vpack.c.bf16 %v763, %v762
        %v772 = vld [vmem:[#allocation9] sm:$0xf]
        %v773 = vld [vmem:[#allocation9 + $0x4] sm:$0xf]
        %v774 = vld [vmem:[#allocation9 + $0x8] sm:$0xf]
        %v775 = vld [vmem:[#allocation9 + $0xc] sm:$0xf]
        %v776 = vld [vmem:[#allocation9 + $0x10] sm:$0xf]
        %v777 = vld [vmem:[#allocation9 + $0x14] sm:$0xf]
        %v778 = vld [vmem:[#allocation9 + $0x18] sm:$0xf]
        %v779 = vld [vmem:[#allocation9 + $0x1c] sm:$0xf]
        %v780 = vld [vmem:[#allocation9 + $0x20] sm:$0xf]
        %v781 = vld [vmem:[#allocation9 + $0x24] sm:$0xf]
        %v782 = vld [vmem:[#allocation9 + $0x28] sm:$0xf]
        %v783 = vld [vmem:[#allocation9 + $0x2c] sm:$0xf]
        %v784 = vld [vmem:[#allocation9 + $0x30] sm:$0xf]
        %v785 = vld [vmem:[#allocation9 + $0x34] sm:$0xf]
        %v786 = vld [vmem:[#allocation9 + $0x38] sm:$0xf]
        %v787 = vld [vmem:[#allocation9 + $0x3c] sm:$0xf]
        %v788 = vld [vmem:[#allocation11] sm:$0x1]
        %v790 = vlaneseq
        %v791 = vshrl.u32 %v790, 7
        %v792 = vsub.s32 0, %v791
        %v793 = vrot.slane %v788, %v792
        %v811 = vunpack.c.l.b16 %v772
        %v812 = vunpack.c.l.b16 %v773
        %v813 = vunpack.c.l.b16 %v774
        %v814 = vunpack.c.l.b16 %v775
        %v815 = vunpack.c.l.b16 %v776
        %v816 = vunpack.c.l.b16 %v777
        %v817 = vunpack.c.l.b16 %v778
        %v818 = vunpack.c.l.b16 %v779
        %v819 = vunpack.c.l.b16 %v780
        %v820 = vunpack.c.l.b16 %v781
        %v821 = vunpack.c.l.b16 %v782
        %v822 = vunpack.c.l.b16 %v783
        %v823 = vunpack.c.l.b16 %v784
        %v824 = vunpack.c.l.b16 %v785
        %v825 = vunpack.c.l.b16 %v786
        %v826 = vunpack.c.l.b16 %v787
        %v827 = vpack.c.b16 %v812, %v811
        %v828 = vpack.c.b16 %v814, %v813
        %v829 = vpack.c.b16 %v816, %v815
        %v830 = vpack.c.b16 %v818, %v817
        %v831 = vpack.c.b16 %v820, %v819
        %v832 = vpack.c.b16 %v822, %v821
        %v833 = vpack.c.b16 %v824, %v823
        %v834 = vpack.c.b16 %v826, %v825
        %843 = vmatprep.subr.bf16.mxu0 0
        %844 = vmatpush1.bf16.msra.mxu0 %v827
        %845 = vmatprep.subr.bf16.mxu0 0
        %846 = vmatpush1.bf16.msra.mxu0 %v828
        %847 = vmatprep.subr.bf16.mxu0 0
        %848 = vmatpush1.bf16.msra.mxu0 %v829
        %849 = vmatprep.subr.bf16.mxu0 0
        %850 = vmatpush1.bf16.msra.mxu0 %v830
        %851 = vmatprep.subr.bf16.mxu0 0
        %852 = vmatpush1.bf16.msra.mxu0 %v831
        %853 = vmatprep.subr.bf16.mxu0 0
        %854 = vmatpush1.bf16.msra.mxu0 %v832
        %855 = vmatprep.subr.bf16.mxu0 0
        %856 = vmatpush1.bf16.msra.mxu0 %v833
        %857 = vmatprep.subr.bf16.mxu0 0
        %858 = vmatpush1.bf16.msra.mxu0 %v834
        %859 = vmatprep.subr.bf16.mxu0 0
        %860 = vmatpush1.bf16.msra.mxu0 0
        %861 = vmatprep.subr.bf16.mxu0 0
        %862 = vmatpush1.bf16.msra.mxu0 0
        %863 = vmatprep.subr.bf16.mxu0 0
        %864 = vmatpush1.bf16.msra.mxu0 0
        %865 = vmatprep.subr.bf16.mxu0 0
        %866 = vmatpush1.bf16.msra.mxu0 0
        %867 = vmatprep.subr.bf16.mxu0 0
        %868 = vmatpush1.bf16.msra.mxu0 0
        %869 = vmatprep.subr.bf16.mxu0 0
        %870 = vmatpush1.bf16.msra.mxu0 0
        %871 = vmatprep.subr.bf16.mxu0 0
        %872 = vmatpush1.bf16.msra.mxu0 0
        %873 = vmatprep.subr.bf16.mxu0 0
        %874 = vmatpush1.bf16.msra.mxu0 0
        %875 = vmatprep.mubr.bf16.mxu0 0
        %876 = vmatmul.mubr.bf16.gmra.mrb[0].mxu0 %v764
        %v877 = vpop.f32.mrb[0].mxu0
        %v878 = vadd.f32 %v793, %v877
        %v879 = vpop.f32.mrb[0].mxu0
        %v880 = vpop.f32.mrb[0].mxu0
        %v881 = vadd.f32 %v793, %v880
        %v882 = vpop.f32.mrb[0].mxu0
        %883 = vmatprep.mubr.bf16.mxu0 0
        %884 = vmatmul.mubr.bf16.gmra.mrb[0].mxu0 %v765
        %v885 = vpop.f32.mrb[0].mxu0
        %v886 = vadd.f32 %v793, %v885
        %v887 = vpop.f32.mrb[0].mxu0
        %v888 = vpop.f32.mrb[0].mxu0
        %v889 = vadd.f32 %v793, %v888
        %v890 = vpop.f32.mrb[0].mxu0
        %891 = vmatprep.mubr.bf16.mxu0 0
        %892 = vmatmul.mubr.bf16.gmra.mrb[0].mxu0 %v766
        %v893 = vpop.f32.mrb[0].mxu0
        %v894 = vadd.f32 %v793, %v893
        %v895 = vpop.f32.mrb[0].mxu0
        %v896 = vpop.f32.mrb[0].mxu0
        %v897 = vadd.f32 %v793, %v896
        %v898 = vpop.f32.mrb[0].mxu0
        %899 = vmatprep.mubr.bf16.mxu0 0
        %900 = vmatmul.mubr.bf16.gmra.mrb[0].mxu0 %v767
        %v901 = vpop.f32.mrb[0].mxu0
        %v902 = vadd.f32 %v793, %v901
        %v903 = vpop.f32.mrb[0].mxu0
        %v904 = vpop.f32.mrb[0].mxu0
        %v905 = vadd.f32 %v793, %v904
        %v906 = vpop.f32.mrb[0].mxu0
        %907 = vmatprep.mubr.bf16.mxu0 0
        %908 = vmatmul.mubr.bf16.gmra.mrb[0].mxu0 %v768
        %v909 = vpop.f32.mrb[0].mxu0
        %v910 = vadd.f32 %v793, %v909
        %v911 = vpop.f32.mrb[0].mxu0
        %v912 = vpop.f32.mrb[0].mxu0
        %v913 = vadd.f32 %v793, %v912
        %v914 = vpop.f32.mrb[0].mxu0
        %915 = vmatprep.mubr.bf16.mxu0 0
        %916 = vmatmul.mubr.bf16.gmra.mrb[0].mxu0 %v769
        %v917 = vpop.f32.mrb[0].mxu0
        %v918 = vadd.f32 %v793, %v917
        %v919 = vpop.f32.mrb[0].mxu0
        %v920 = vpop.f32.mrb[0].mxu0
        %v921 = vadd.f32 %v793, %v920
        %v922 = vpop.f32.mrb[0].mxu0
        %923 = vmatprep.mubr.bf16.mxu0 0
        %924 = vmatmul.mubr.bf16.gmra.mrb[0].mxu0 %v770
        %v925 = vpop.f32.mrb[0].mxu0
        %v926 = vadd.f32 %v793, %v925
        %v927 = vpop.f32.mrb[0].mxu0
        %v928 = vpop.f32.mrb[0].mxu0
        %v929 = vadd.f32 %v793, %v928
        %v930 = vpop.f32.mrb[0].mxu0
        %931 = vmatprep.mubr.bf16.mxu0 0
        %932 = vmatmul.mubr.bf16.gmra.mrb[0].mxu0 %v771
        %v933 = vpop.f32.mrb[0].mxu0
        %v934 = vadd.f32 %v793, %v933
        %v935 = vpop.f32.mrb[0].mxu0
        %v936 = vpop.f32.mrb[0].mxu0
        %v937 = vadd.f32 %v793, %v936
        %v938 = vpop.f32.mrb[0].mxu0
        %939 = vdwg.mxu0
        %v940 = vtanh.pop %v878
        %v941 = vtanh.pop %v881
        %v942 = vtanh.pop %v886
        %v943 = vtanh.pop %v889
        %v944 = vtanh.pop %v894
        %v945 = vtanh.pop %v897
        %v946 = vtanh.pop %v902
        %v947 = vtanh.pop %v905
        %v948 = vtanh.pop %v910
        %v949 = vtanh.pop %v913
        %v950 = vtanh.pop %v918
        %v951 = vtanh.pop %v921
        %v952 = vtanh.pop %v926
        %v953 = vtanh.pop %v929
        %v954 = vtanh.pop %v934
        %v955 = vtanh.pop %v937
        %v956 = vpack.c.bf16 %v941, %v940
        %v957 = vpack.c.bf16 %v943, %v942
        %v958 = vpack.c.bf16 %v945, %v944
        %v959 = vpack.c.bf16 %v947, %v946
        %v960 = vpack.c.bf16 %v949, %v948
        %v961 = vpack.c.bf16 %v951, %v950
        %v962 = vpack.c.bf16 %v953, %v952
        %v963 = vpack.c.bf16 %v955, %v954
        %v964 = vld [vmem:[#allocation12] sm:$0xf]
        %v965 = vld [vmem:[#allocation12 + $0x4] sm:$0xf]
        %v966 = vld [vmem:[#allocation12 + $0x8] sm:$0xf]
        %v967 = vld [vmem:[#allocation12 + $0xc] sm:$0xf]
        %v968 = vld [vmem:[#allocation12 + $0x10] sm:$0xf]
        %v969 = vld [vmem:[#allocation12 + $0x14] sm:$0xf]
        %v970 = vld [vmem:[#allocation12 + $0x18] sm:$0xf]
        %v971 = vld [vmem:[#allocation12 + $0x1c] sm:$0xf]
        %v972 = vld [vmem:[#allocation12 + $0x20] sm:$0xf]
        %v973 = vld [vmem:[#allocation12 + $0x24] sm:$0xf]
        %v974 = vld [vmem:[#allocation12 + $0x28] sm:$0xf]
        %v975 = vld [vmem:[#allocation12 + $0x2c] sm:$0xf]
        %v976 = vld [vmem:[#allocation12 + $0x30] sm:$0xf]
        %v977 = vld [vmem:[#allocation12 + $0x34] sm:$0xf]
        %v978 = vld [vmem:[#allocation12 + $0x38] sm:$0xf]
        %v979 = vld [vmem:[#allocation12 + $0x3c] sm:$0xf]
        %v980 = vld [vmem:[#allocation14] sm:$0x1]
        %v982 = vlaneseq
        %v983 = vshrl.u32 %v982, 7
        %v984 = vsub.s32 0, %v983
        %v985 = vrot.slane %v980, %v984
        %v1003 = vunpack.c.l.b16 %v964
        %v1004 = vunpack.c.l.b16 %v965
        %v1005 = vunpack.c.l.b16 %v966
        %v1006 = vunpack.c.l.b16 %v967
        %v1007 = vunpack.c.l.b16 %v968
        %v1008 = vunpack.c.l.b16 %v969
        %v1009 = vunpack.c.l.b16 %v970
        %v1010 = vunpack.c.l.b16 %v971
        %v1011 = vunpack.c.l.b16 %v972
        %v1012 = vunpack.c.l.b16 %v973
        %v1013 = vunpack.c.l.b16 %v974
        %v1014 = vunpack.c.l.b16 %v975
        %v1015 = vunpack.c.l.b16 %v976
        %v1016 = vunpack.c.l.b16 %v977
        %v1017 = vunpack.c.l.b16 %v978
        %v1018 = vunpack.c.l.b16 %v979
        %v1019 = vpack.c.b16 %v1004, %v1003
        %v1020 = vpack.c.b16 %v1006, %v1005
        %v1021 = vpack.c.b16 %v1008, %v1007
        %v1022 = vpack.c.b16 %v1010, %v1009
        %v1023 = vpack.c.b16 %v1012, %v1011
        %v1024 = vpack.c.b16 %v1014, %v1013
        %v1025 = vpack.c.b16 %v1016, %v1015
        %v1026 = vpack.c.b16 %v1018, %v1017
        %1035 = vmatprep.subr.bf16.mxu0 0
        %1036 = vmatpush1.bf16.msra.mxu0 %v1019
        %1037 = vmatprep.subr.bf16.mxu0 0
        %1038 = vmatpush1.bf16.msra.mxu0 %v1020
        %1039 = vmatprep.subr.bf16.mxu0 0
        %1040 = vmatpush1.bf16.msra.mxu0 %v1021
        %1041 = vmatprep.subr.bf16.mxu0 0
        %1042 = vmatpush1.bf16.msra.mxu0 %v1022
        %1043 = vmatprep.subr.bf16.mxu0 0
        %1044 = vmatpush1.bf16.msra.mxu0 %v1023
        %1045 = vmatprep.subr.bf16.mxu0 0
        %1046 = vmatpush1.bf16.msra.mxu0 %v1024
        %1047 = vmatprep.subr.bf16.mxu0 0
        %1048 = vmatpush1.bf16.msra.mxu0 %v1025
        %1049 = vmatprep.subr.bf16.mxu0 0
        %1050 = vmatpush1.bf16.msra.mxu0 %v1026
        %1051 = vmatprep.subr.bf16.mxu0 0
        %1052 = vmatpush1.bf16.msra.mxu0 0
        %1053 = vmatprep.subr.bf16.mxu0 0
        %1054 = vmatpush1.bf16.msra.mxu0 0
        %1055 = vmatprep.subr.bf16.mxu0 0
        %1056 = vmatpush1.bf16.msra.mxu0 0
        %1057 = vmatprep.subr.bf16.mxu0 0
        %1058 = vmatpush1.bf16.msra.mxu0 0
        %1059 = vmatprep.subr.bf16.mxu0 0
        %1060 = vmatpush1.bf16.msra.mxu0 0
        %1061 = vmatprep.subr.bf16.mxu0 0
        %1062 = vmatpush1.bf16.msra.mxu0 0
        %1063 = vmatprep.subr.bf16.mxu0 0
        %1064 = vmatpush1.bf16.msra.mxu0 0
        %1065 = vmatprep.subr.bf16.mxu0 0
        %1066 = vmatpush1.bf16.msra.mxu0 0
        %1067 = vmatprep.mubr.bf16.mxu0 0
        %1068 = vmatmul.mubr.bf16.gmra.mrb[0].mxu0 %v956
        %v1069 = vpop.f32.mrb[0].mxu0
        %v1070 = vadd.f32 %v985, %v1069
        %v1071 = vpop.f32.mrb[0].mxu0
        %v1072 = vpop.f32.mrb[0].mxu0
        %v1073 = vadd.f32 %v985, %v1072
        %v1074 = vpop.f32.mrb[0].mxu0
        %1075 = vmatprep.mubr.bf16.mxu0 0
        %1076 = vmatmul.mubr.bf16.gmra.mrb[0].mxu0 %v957
        %v1077 = vpop.f32.mrb[0].mxu0
        %v1078 = vadd.f32 %v985, %v1077
        %v1079 = vpop.f32.mrb[0].mxu0
        %v1080 = vpop.f32.mrb[0].mxu0
        %v1081 = vadd.f32 %v985, %v1080
        %v1082 = vpop.f32.mrb[0].mxu0
        %1083 = vmatprep.mubr.bf16.mxu0 0
        %1084 = vmatmul.mubr.bf16.gmra.mrb[0].mxu0 %v958
        %v1085 = vpop.f32.mrb[0].mxu0
        %v1086 = vadd.f32 %v985, %v1085
        %v1087 = vpop.f32.mrb[0].mxu0
        %v1088 = vpop.f32.mrb[0].mxu0
        %v1089 = vadd.f32 %v985, %v1088
        %v1090 = vpop.f32.mrb[0].mxu0
        %1091 = vmatprep.mubr.bf16.mxu0 0
        %1092 = vmatmul.mubr.bf16.gmra.mrb[0].mxu0 %v959
        %v1093 = vpop.f32.mrb[0].mxu0
        %v1094 = vadd.f32 %v985, %v1093
        %v1095 = vpop.f32.mrb[0].mxu0
        %v1096 = vpop.f32.mrb[0].mxu0
        %v1097 = vadd.f32 %v985, %v1096
        %v1098 = vpop.f32.mrb[0].mxu0
        %1099 = vmatprep.mubr.bf16.mxu0 0
        %1100 = vmatmul.mubr.bf16.gmra.mrb[0].mxu0 %v960
        %v1101 = vpop.f32.mrb[0].mxu0
        %v1102 = vadd.f32 %v985, %v1101
        %v1103 = vpop.f32.mrb[0].mxu0
        %v1104 = vpop.f32.mrb[0].mxu0
        %v1105 = vadd.f32 %v985, %v1104
        %v1106 = vpop.f32.mrb[0].mxu0
        %1107 = vmatprep.mubr.bf16.mxu0 0
        %1108 = vmatmul.mubr.bf16.gmra.mrb[0].mxu0 %v961
        %v1109 = vpop.f32.mrb[0].mxu0
        %v1110 = vadd.f32 %v985, %v1109
        %v1111 = vpop.f32.mrb[0].mxu0
        %v1112 = vpop.f32.mrb[0].mxu0
        %v1113 = vadd.f32 %v985, %v1112
        %v1114 = vpop.f32.mrb[0].mxu0
        %1115 = vmatprep.mubr.bf16.mxu0 0
        %1116 = vmatmul.mubr.bf16.gmra.mrb[0].mxu0 %v962
        %v1117 = vpop.f32.mrb[0].mxu0
        %v1118 = vadd.f32 %v985, %v1117
        %v1119 = vpop.f32.mrb[0].mxu0
        %v1120 = vpop.f32.mrb[0].mxu0
        %v1121 = vadd.f32 %v985, %v1120
        %v1122 = vpop.f32.mrb[0].mxu0
        %1123 = vmatprep.mubr.bf16.mxu0 0
        %1124 = vmatmul.mubr.bf16.gmra.mrb[0].mxu0 %v963
        %v1125 = vpop.f32.mrb[0].mxu0
        %v1126 = vadd.f32 %v985, %v1125
        %v1127 = vpop.f32.mrb[0].mxu0
        %v1128 = vpop.f32.mrb[0].mxu0
        %v1129 = vadd.f32 %v985, %v1128
        %v1130 = vpop.f32.mrb[0].mxu0
        %1131 = vdwg.mxu0
        %v1132 = vtanh.pop %v1070
        %v1133 = vtanh.pop %v1073
        %v1134 = vtanh.pop %v1078
        %v1135 = vtanh.pop %v1081
        %v1136 = vtanh.pop %v1086
        %v1137 = vtanh.pop %v1089
        %v1138 = vtanh.pop %v1094
        %v1139 = vtanh.pop %v1097
        %v1140 = vtanh.pop %v1102
        %v1141 = vtanh.pop %v1105
        %v1142 = vtanh.pop %v1110
        %v1143 = vtanh.pop %v1113
        %v1144 = vtanh.pop %v1118
        %v1145 = vtanh.pop %v1121
        %v1146 = vtanh.pop %v1126
        %v1147 = vtanh.pop %v1129
        %v1148 = vpack.c.bf16 %v1133, %v1132
        %v1149 = vpack.c.bf16 %v1135, %v1134
        %v1150 = vpack.c.bf16 %v1137, %v1136
        %v1151 = vpack.c.bf16 %v1139, %v1138
        %v1152 = vpack.c.bf16 %v1141, %v1140
        %v1153 = vpack.c.bf16 %v1143, %v1142
        %v1154 = vpack.c.bf16 %v1145, %v1144
        %v1155 = vpack.c.bf16 %v1147, %v1146
        %v1156 = vld [vmem:[#allocation15] sm:$0xf]
        %v1157 = vld [vmem:[#allocation15 + $0x4] sm:$0xf]
        %v1158 = vld [vmem:[#allocation15 + $0x8] sm:$0xf]
        %v1159 = vld [vmem:[#allocation15 + $0xc] sm:$0xf]
        %v1160 = vld [vmem:[#allocation15 + $0x10] sm:$0xf]
        %v1161 = vld [vmem:[#allocation15 + $0x14] sm:$0xf]
        %v1162 = vld [vmem:[#allocation15 + $0x18] sm:$0xf]
        %v1163 = vld [vmem:[#allocation15 + $0x1c] sm:$0xf]
        %v1164 = vld [vmem:[#allocation15 + $0x20] sm:$0xf]
        %v1165 = vld [vmem:[#allocation15 + $0x24] sm:$0xf]
        %v1166 = vld [vmem:[#allocation15 + $0x28] sm:$0xf]
        %v1167 = vld [vmem:[#allocation15 + $0x2c] sm:$0xf]
        %v1168 = vld [vmem:[#allocation15 + $0x30] sm:$0xf]
        %v1169 = vld [vmem:[#allocation15 + $0x34] sm:$0xf]
        %v1170 = vld [vmem:[#allocation15 + $0x38] sm:$0xf]
        %v1171 = vld [vmem:[#allocation15 + $0x3c] sm:$0xf]
        %s1172 = sld [smem:[#allocation2]]
        %v1173 = vstv %s1172
        %v1190 = vunpack.c.l.b16 %v1156
        %v1191 = vunpack.c.l.b16 %v1157
        %v1192 = vunpack.c.l.b16 %v1158
        %v1193 = vunpack.c.l.b16 %v1159
        %v1194 = vunpack.c.l.b16 %v1160
        %v1195 = vunpack.c.l.b16 %v1161
        %v1196 = vunpack.c.l.b16 %v1162
        %v1197 = vunpack.c.l.b16 %v1163
        %v1198 = vunpack.c.l.b16 %v1164
        %v1199 = vunpack.c.l.b16 %v1165
        %v1200 = vunpack.c.l.b16 %v1166
        %v1201 = vunpack.c.l.b16 %v1167
        %v1202 = vunpack.c.l.b16 %v1168
        %v1203 = vunpack.c.l.b16 %v1169
        %v1204 = vunpack.c.l.b16 %v1170
        %v1205 = vunpack.c.l.b16 %v1171
        %v1206 = vpack.c.b16 %v1191, %v1190
        %v1207 = vpack.c.b16 %v1193, %v1192
        %v1208 = vpack.c.b16 %v1195, %v1194
        %v1209 = vpack.c.b16 %v1197, %v1196
        %v1210 = vpack.c.b16 %v1199, %v1198
        %v1211 = vpack.c.b16 %v1201, %v1200
        %v1212 = vpack.c.b16 %v1203, %v1202
        %v1213 = vpack.c.b16 %v1205, %v1204
        %1222 = vmatprep.subr.bf16.mxu0 0
        %1223 = vmatpush1.bf16.msra.mxu0 %v1206
        %1224 = vmatprep.subr.bf16.mxu0 0
        %1225 = vmatpush1.bf16.msra.mxu0 %v1207
        %1226 = vmatprep.subr.bf16.mxu0 0
        %1227 = vmatpush1.bf16.msra.mxu0 %v1208
        %1228 = vmatprep.subr.bf16.mxu0 0
        %1229 = vmatpush1.bf16.msra.mxu0 %v1209
        %1230 = vmatprep.subr.bf16.mxu0 0
        %1231 = vmatpush1.bf16.msra.mxu0 %v1210
        %1232 = vmatprep.subr.bf16.mxu0 0
        %1233 = vmatpush1.bf16.msra.mxu0 %v1211
        %1234 = vmatprep.subr.bf16.mxu0 0
        %1235 = vmatpush1.bf16.msra.mxu0 %v1212
        %1236 = vmatprep.subr.bf16.mxu0 0
        %1237 = vmatpush1.bf16.msra.mxu0 %v1213
        %1238 = vmatprep.subr.bf16.mxu0 0
        %1239 = vmatpush1.bf16.msra.mxu0 0
        %1240 = vmatprep.subr.bf16.mxu0 0
        %1241 = vmatpush1.bf16.msra.mxu0 0
        %1242 = vmatprep.subr.bf16.mxu0 0
        %1243 = vmatpush1.bf16.msra.mxu0 0
        %1244 = vmatprep.subr.bf16.mxu0 0
        %1245 = vmatpush1.bf16.msra.mxu0 0
        %1246 = vmatprep.subr.bf16.mxu0 0
        %1247 = vmatpush1.bf16.msra.mxu0 0
        %1248 = vmatprep.subr.bf16.mxu0 0
        %1249 = vmatpush1.bf16.msra.mxu0 0
        %1250 = vmatprep.subr.bf16.mxu0 0
        %1251 = vmatpush1.bf16.msra.mxu0 0
        %1252 = vmatprep.subr.bf16.mxu0 0
        %1253 = vmatpush1.bf16.msra.mxu0 0
        %1254 = vmatprep.mubr.bf16.mxu0 0
        %1255 = vmatmul.mubr.bf16.gmra.mrb[0].mxu0 %v1148
        %v1256 = vpop.f32.mrb[0].mxu0
        %v1257 = vadd.f32 %v1173, %v1256
        %v1258 = vpop.f32.mrb[0].mxu0
        %v1259 = vpop.f32.mrb[0].mxu0
        %v1260 = vadd.f32 %v1173, %v1259
        %v1261 = vpop.f32.mrb[0].mxu0
        %1262 = vmatprep.mubr.bf16.mxu0 0
        %1263 = vmatmul.mubr.bf16.gmra.mrb[0].mxu0 %v1149
        %v1264 = vpop.f32.mrb[0].mxu0
        %v1265 = vadd.f32 %v1173, %v1264
        %v1266 = vpop.f32.mrb[0].mxu0
        %v1267 = vpop.f32.mrb[0].mxu0
        %v1268 = vadd.f32 %v1173, %v1267
        %v1269 = vpop.f32.mrb[0].mxu0
        %1270 = vmatprep.mubr.bf16.mxu0 0
        %1271 = vmatmul.mubr.bf16.gmra.mrb[0].mxu0 %v1150
        %v1272 = vpop.f32.mrb[0].mxu0
        %v1273 = vadd.f32 %v1173, %v1272
        %v1274 = vpop.f32.mrb[0].mxu0
        %v1275 = vpop.f32.mrb[0].mxu0
        %v1276 = vadd.f32 %v1173, %v1275
        %v1277 = vpop.f32.mrb[0].mxu0
        %1278 = vmatprep.mubr.bf16.mxu0 0
        %1279 = vmatmul.mubr.bf16.gmra.mrb[0].mxu0 %v1151
        %v1280 = vpop.f32.mrb[0].mxu0
        %v1281 = vadd.f32 %v1173, %v1280
        %v1282 = vpop.f32.mrb[0].mxu0
        %v1283 = vpop.f32.mrb[0].mxu0
        %v1284 = vadd.f32 %v1173, %v1283
        %v1285 = vpop.f32.mrb[0].mxu0
        %1286 = vmatprep.mubr.bf16.mxu0 0
        %1287 = vmatmul.mubr.bf16.gmra.mrb[0].mxu0 %v1152
        %v1288 = vpop.f32.mrb[0].mxu0
        %v1289 = vadd.f32 %v1173, %v1288
        %v1290 = vpop.f32.mrb[0].mxu0
        %v1291 = vpop.f32.mrb[0].mxu0
        %v1292 = vadd.f32 %v1173, %v1291
        %v1293 = vpop.f32.mrb[0].mxu0
        %1294 = vmatprep.mubr.bf16.mxu0 0
        %1295 = vmatmul.mubr.bf16.gmra.mrb[0].mxu0 %v1153
        %v1296 = vpop.f32.mrb[0].mxu0
        %v1297 = vadd.f32 %v1173, %v1296
        %v1298 = vpop.f32.mrb[0].mxu0
        %v1299 = vpop.f32.mrb[0].mxu0
        %v1300 = vadd.f32 %v1173, %v1299
        %v1301 = vpop.f32.mrb[0].mxu0
        %1302 = vmatprep.mubr.bf16.mxu0 0
        %1303 = vmatmul.mubr.bf16.gmra.mrb[0].mxu0 %v1154
        %v1304 = vpop.f32.mrb[0].mxu0
        %v1305 = vadd.f32 %v1173, %v1304
        %v1306 = vpop.f32.mrb[0].mxu0
        %v1307 = vpop.f32.mrb[0].mxu0
        %v1308 = vadd.f32 %v1173, %v1307
        %v1309 = vpop.f32.mrb[0].mxu0
        %1310 = vmatprep.mubr.bf16.mxu0 0
        %1311 = vmatmul.mubr.bf16.gmra.mrb[0].mxu0 %v1155
        %v1312 = vpop.f32.mrb[0].mxu0
        %v1313 = vadd.f32 %v1173, %v1312
        %v1314 = vpop.f32.mrb[0].mxu0
        %v1315 = vpop.f32.mrb[0].mxu0
        %v1316 = vadd.f32 %v1173, %v1315
        %v1317 = vpop.f32.mrb[0].mxu0
        %1318 = vdwg.mxu0
        %vm1319 = vcmask 7168
        %1320 = vst.msk [vmem:[%s515] sm:$0xff] %vm1319, %v1257
        %1321 = vst.msk [vmem:[%s515 + $0x8] sm:$0xff] %vm1319, %v1260
        %1322 = vst.msk [vmem:[%s515 + $0x10] sm:$0xff] %vm1319, %v1265
        %1323 = vst.msk [vmem:[%s515 + $0x18] sm:$0xff] %vm1319, %v1268
        %1324 = vst.msk [vmem:[%s515 + $0x20] sm:$0xff] %vm1319, %v1273
        %1325 = vst.msk [vmem:[%s515 + $0x28] sm:$0xff] %vm1319, %v1276
        %1326 = vst.msk [vmem:[%s515 + $0x30] sm:$0xff] %vm1319, %v1281
        %1327 = vst.msk [vmem:[%s515 + $0x38] sm:$0xff] %vm1319, %v1284
        %1328 = vst.msk [vmem:[%s515 + $0x40] sm:$0xff] %vm1319, %v1289
        %1329 = vst.msk [vmem:[%s515 + $0x48] sm:$0xff] %vm1319, %v1292
        %1330 = vst.msk [vmem:[%s515 + $0x50] sm:$0xff] %vm1319, %v1297
        %1331 = vst.msk [vmem:[%s515 + $0x58] sm:$0xff] %vm1319, %v1300
        %1332 = vst.msk [vmem:[%s515 + $0x60] sm:$0xff] %vm1319, %v1305
        %1333 = vst.msk [vmem:[%s515 + $0x68] sm:$0xff] %vm1319, %v1308
        %1334 = vst.msk [vmem:[%s515 + $0x70] sm:$0xff] %vm1319, %v1313
        %1335 = vst.msk [vmem:[%s515 + $0x78] sm:$0xff] %vm1319, %v1316
        %s1336 = sand.u32 %s245, 1
        %s1337 = scalar_lea.sflag [#allocation5], %s1336
        %s1338 = sand.u32 %s245, 1
        %s1339 = smul.addr %s1338, 128
        %s1340 = scalar_lea.vmem [#allocation17], %s1339
        // Predicated region
        $region89: #{_forward.1} parent=55 // pred_check
          %p1341 = pneg %p255
        $region90: #{_forward.1} parent=55 // pred_check_branch
          %1343 = sbr.rel (%p1341) target = $region92
        $region91: #{_forward.1} parent=55 // pred_region
          %s1344 = smul.u32 16, %s33
          %s1345 = ssub.s32 25, %s1344
          %p1346 = scmp.lt.s32.totalorder %s1345, 16
          %s1347 = scalar_select %p1346, %s1345, 16
          %s1348 = smul.u32 128, %s1347
          %s1350 = ssub.s32 2048, %s1348
          %1351 = vsyncadd %s1337, %s1350
          %p1352 = scmp.ne.s32.totalorder 0, %s1348
          %s1353 = smul.addr %s1344, 128
          %s1354 = scalar_lea.hbm %s9, %s1353
          %s1355 = smul.u32 8, %s1347
          %s1356 = sshll.u32 %s1340, 4
          %s1357 = int_to_ptr.vmem [resolvable:$true] %s1356
          %s1358 = sshll.u32 %s1355, 4
          %1362 = dma.vmem_to_hbm [thread:$0]  (%p1352), %s1357, %s1358, %s1354, %s1337, 128, 128, 8
        $region92: #{_forward.1} parent=55 // pred_fallthru
          _
      $region56: #{_forward.1} parent=5 // pred_fallthru
        _
      %p1363 = scmp.le.s32.totalorder 2, %s28
      // Predicated region
      $region93: #{_forward.1} parent=5 // pred_check
        %p1364 = pneg %p1363
      $region94: #{_forward.1} parent=5 // pred_check_branch
        %1366 = sbr.rel (%p1364) target = $region96
      $region95: #{_forward.1} parent=5 // pred_region
        %s1367 = ssub.s32 %s28, 2
        // Predicated region
        $region97: #{_forward.1} parent=95 // pred_check
          %p1368 = pneg %p261
        $region98: #{_forward.1} parent=95 // pred_check_branch
          %1370 = sbr.rel (%p1368) target = $region100
        $region99: #{_forward.1} parent=95 // pred_region
          %s1371 = sand.u32 %s246, 1
          %s1372 = scalar_lea.sflag [#allocation5], %s1371
          %s1373 = sand.u32 %s246, 1
          %s1374 = smul.addr %s1373, 128
          %s1375 = scalar_lea.vmem [#allocation17], %s1374
          %1376 = dma.done %s1372, 2048
        $region100: #{_forward.1} parent=95 // pred_fallthru
          _
      $region96: #{_forward.1} parent=5 // pred_fallthru
        _
    $region6: #{_forward.1} parent=1 // loop_footer
      %s32 = sadd.s32 1, %s28
    $region7: #{_forward.1} parent=1 // loop_footer_branch
      %27 = sbr.rel target = $region3
    $region8: #{_forward.1} parent=1 // loop_exit
      _
    %1377 = vsyncpa [#allocation4], 1
    %s1378 = scalar_lea.sflag [#allocation4], 1
    %1379 = vsyncpa %s1378, 1
    %1380 = vsyncpa [#allocation7], 1
    %s1381 = scalar_lea.sflag [#allocation7], 1
    %1382 = vsyncpa %s1381, 1
    %1383 = vsyncpa [#allocation10], 1
    %1384 = vsyncpa [#allocation13], 1
    %1385 = vsyncpa [#allocation16], 1
    %1386 = vsyncpa [#allocation5], 1
    %s1387 = scalar_lea.sflag [#allocation5], 1
    %1388 = vsyncpa %s1387, 1

</llo_original>
